<compile_context>
chip_gen: v6e
topology: v6e:2x2x1
jax: 0.10.0
libtpu: 0.0.40
codegen_flags: <defaults>
</compile_context>

<pallas_src>
import jax
import jax.numpy as jnp
from jax import lax
from jax.experimental import pallas as pl
from jax.experimental.pallas import tpu as pltpu


def _round_up(x: int, m: int) -> int:
    return (x + m - 1) // m * m


def _linear_relu_kernel(x_ref, w_ref, b_ref, o_ref):
    # x_ref: (tm, D_in_p) compute_dtype, w_ref: (D_in_p, tn) compute_dtype
    # (VMEM-resident, single-buffered), b_ref: (1, tn) f32, o_ref: (tm, tn) f32.
    y = jnp.dot(x_ref[...], w_ref[...], preferred_element_type=jnp.float32)
    y = y + b_ref[...]                       # (1, tn) broadcasts over rows
    o_ref[...] = jnp.maximum(y, 0.0).astype(o_ref.dtype)


def _pick_tiles(B, D_in_p, D_out_p, in_bytes, block_batch):
    # Budgets keep every tile comfortably inside the default scoped VMEM
    # (16 MiB v5e, 32 MiB v6e/v7x) even with double-buffered x/out.
    X_TILE_BUDGET = 4 << 20   # per x tile (double-buffered -> 8 MiB worst case)
    W_TILE_BUDGET = 4 << 20   # resident weight tile (single-buffered)

    if B >= block_batch:
        tm = block_batch                       # multiple of 128 for large B
    else:
        tm = _round_up(max(B, 1), 16)          # covers bf16 sublane packing
    max_tm = max(16, (X_TILE_BUDGET // (D_in_p * in_bytes)) // 16 * 16)
    tm = min(tm, max_tm)

    max_tn = max(128, (W_TILE_BUDGET // (D_in_p * in_bytes)) // 128 * 128)
    tn = min(D_out_p, max_tn)
    while D_out_p % tn:                        # keep tn an exact divisor
        tn -= 128
    # TODO(synk): if D_in_p alone exceeds the weight budget, add a K grid axis
    # with an f32 acc scratch + pl.when init/finalize.
    return tm, tn


def _forward_padded(x, w_p, b_p, *, block_batch):
    """x: (B, D_in). w_p: (D_in_p, D_out_p) pre-padded/cast. b_p: (1, D_out_p) f32."""
    B, D_in = x.shape
    D_in_p, D_out_p = w_p.shape
    cdt = w_p.dtype
    in_bytes = jnp.dtype(cdt).itemsize

    # Lane-pad only the contraction dim (must be exact zeros); fused with cast.
    x_c = x.astype(cdt)
    if D_in_p != D_in:
        x_c = lax.pad(x_c, jnp.zeros((), cdt),
                      ((0, 0, 0), (0, D_in_p - D_in, 0)))

    tm, tn = _pick_tiles(B, D_in_p, D_out_p, in_bytes, block_batch)
    num_b = pl.cdiv(B, tm)          # partial last batch tile: OOB rows dropped
    num_n = D_out_p // tn

    cost = pl.CostEstimate(
        flops=2 * B * D_in_p * D_out_p,
        transcendentals=0,
        bytes_accessed=(B * D_in_p * in_bytes          # x
                        + D_in_p * D_out_p * in_bytes  # w
                        + D_out_p * 4                  # b
                        + B * D_out_p * 4),            # out
    )

    return pl.pallas_call(
        _linear_relu_kernel,
        out_shape=jax.ShapeDtypeStruct((B, D_out_p), jnp.float32),
        grid_spec=pl.GridSpec(
            # N outer (weight re-fetched only num_n times), batch inner so x/out
            # DMAs pipeline behind MXU work while the weight tile stays resident.
            grid=(num_n, num_b),
            in_specs=[
                pl.BlockSpec((tm, D_in_p), lambda n, b: (b, 0)),
                pl.BlockSpec((D_in_p, tn), lambda n, b: (0, n),
                             pipeline_mode=pl.Buffered(1)),   # resident weight
                pl.BlockSpec((1, tn), lambda n, b: (0, n),
                             pipeline_mode=pl.Buffered(1)),   # resident bias
            ],
            out_specs=pl.BlockSpec((tm, tn), lambda n, b: (b, n)),
        ),
        compiler_params=pltpu.CompilerParams(
            dimension_semantics=("parallel", "parallel"),
        ),
        cost_estimate=cost,
    )(x_c, w_p, b_p)


def make_idea_historical_layer(w, b, *, block_batch: int = 512,
                               compute_dtype=jnp.bfloat16,
                               slice_output: bool = True):
    """Build the layer once (pads + casts params), return a jitted apply(x).

    w: (D_in, D_out) float32  (transpose of torch Linear.weight)
    b: (D_out,) or (1, D_out) float32
    compute_dtype: jnp.bfloat16 (default, MXU-native) or jnp.float32 escape hatch.
    slice_output: if False, return the padded (B, D_out_p) f32 slab for a fused
                  downstream consumer (skips the post-kernel slice copy).
    """
    D_in, D_out = w.shape
    D_in_p = _round_up(D_in, 128)
    D_out_p = _round_up(D_out, 128)

    # One-time parameter prep (hoisted out of the per-call path).
    w_p = jnp.zeros((D_in_p, D_out_p), compute_dtype).at[:D_in, :D_out].set(
        w.astype(compute_dtype))
    b_p = jnp.zeros((1, D_out_p), jnp.float32).at[:, :D_out].set(
        jnp.reshape(b, (1, D_out)).astype(jnp.float32))

    @jax.jit
    def apply(x):
        out_p = _forward_padded(x, w_p, b_p, block_batch=block_batch)
        if slice_output:
            return out_p[:, :D_out].astype(x.dtype)
        return out_p

    return apply


def idea_historical_layer(x, w, b, **kwargs):
    # Convenience one-shot entry point; prefer make_idea_historical_layer so
    # parameter prep + compilation are amortized across calls.
    return make_idea_historical_layer(w, b, **kwargs)(x)


if __name__ == "__main__":
    # Small shapes consistent with the module's forward.
    batch = 8
    historical_idea_dim = 32
    hidden_dim = 64
    out_dim = hidden_dim // 2

    key = jax.random.PRNGKey(0)
    kx, kw, kb = jax.random.split(key, 3)

    x = jax.random.normal(kx, (batch, historical_idea_dim), dtype=jnp.float32)
    bound = 1.0 / (historical_idea_dim ** 0.5)
    w = jax.random.uniform(kw, (historical_idea_dim, out_dim),
                           minval=-bound, maxval=bound, dtype=jnp.float32)
    b = jax.random.uniform(kb, (out_dim,),
                           minval=-bound, maxval=bound, dtype=jnp.float32)

    layer = make_idea_historical_layer(w, b)   # params padded/cast once here
    out = layer(x)
    jax.block_until_ready(out)
    assert out.shape == (batch, out_dim)

    # Reference 1: same bf16-rounded operands, f32 accumulation (tight check).
    xb = x.astype(jnp.bfloat16).astype(jnp.float32)
    wb = w.astype(jnp.bfloat16).astype(jnp.float32)
    ref_bf16 = jnp.maximum(xb @ wb + b[None, :], 0.0)
    assert jnp.allclose(out, ref_bf16, atol=1e-3, rtol=1e-3)

    # Reference 2: full f32 math (loosened tolerance for bf16 MXU inputs).
    ref_f32 = jnp.maximum(x @ w + b[None, :], 0.0)
    assert jnp.allclose(out, ref_f32, atol=5e-2, rtol=5e-2)

    print("KERNEL_OK")
</pallas_src>

<mosaic_0001>
module attributes {stable_mosaic.version = 11 : i64} {
  func.func @_linear_relu_kernel(%arg0: i32, %arg1: i32, %arg2: memref<16x128xbf16, #tpu.memory_space<vmem>>, %arg3: memref<128x128xbf16, #tpu.memory_space<vmem>>, %arg4: memref<1x128xf32, #tpu.memory_space<vmem>>, %arg5: memref<16x128xf32, #tpu.memory_space<vmem>>) attributes {dimension_semantics = [#tpu.dimension_semantics<parallel>, #tpu.dimension_semantics<parallel>], iteration_bounds = array<i64: 1, 1>, scalar_prefetch = 0 : i64, scratch_operands = 0 : i64, tpu.core_type = #tpu.core_type<tc>, window_params = [{transform_indices = @transform_0, window_bounds = array<i64: 16, 128>}, {pipeline_mode = #tpu.pipeline_mode<synchronous>, transform_indices = @transform_1, window_bounds = array<i64: 128, 128>}, {pipeline_mode = #tpu.pipeline_mode<synchronous>, transform_indices = @transform_2, window_bounds = array<i64: 1, 128>}, {transform_indices = @transform_3, window_bounds = array<i64: 16, 128>}]} {
    %c0 = arith.constant 0 : index
    %c0_0 = arith.constant 0 : index
    %0 = vector.load %arg2[%c0, %c0_0] : memref<16x128xbf16, #tpu.memory_space<vmem>>, vector<16x128xbf16>
    %c0_1 = arith.constant 0 : index
    %c0_2 = arith.constant 0 : index
    %1 = vector.load %arg3[%c0_1, %c0_2] : memref<128x128xbf16, #tpu.memory_space<vmem>>, vector<128x128xbf16>
    %cst = arith.constant dense<0.000000e+00> : vector<16x128xf32>
    %2 = tpu.matmul %0, %1, %cst {dimension_numbers = #tpu.dot_dimension_numbers<[1], [0], [0], [1], [0, 0, 1, 1], [], []>} : vector<16x128xbf16>, vector<128x128xbf16>, vector<16x128xf32> -> vector<16x128xf32>
    %c0_3 = arith.constant 0 : index
    %c0_4 = arith.constant 0 : index
    %3 = vector.load %arg4[%c0_3, %c0_4] : memref<1x128xf32, #tpu.memory_space<vmem>>, vector<1x128xf32>
    %4 = vector.broadcast %3 : vector<1x128xf32> to vector<16x128xf32>
    %5 = arith.addf %2, %4 : vector<16x128xf32>
    %cst_5 = arith.constant 0.000000e+00 : f32
    %6 = vector.broadcast %cst_5 : f32 to vector<16x128xf32>
    %7 = arith.maximumf %5, %6 : vector<16x128xf32>
    %c0_6 = arith.constant 0 : index
    %c0_7 = arith.constant 0 : index
    %8 = vector.load %arg5[%c0_6, %c0_7] : memref<16x128xf32, #tpu.memory_space<vmem>>, vector<16x128xf32>
    tpu.vector_store %arg5[%c0_6, %c0_7], %7 {strides = array<i32>} : memref<16x128xf32, #tpu.memory_space<vmem>>, vector<16x128xf32>,
    return
  }
  func.func @transform_0(%arg0: i32, %arg1: i32) -> (i32, i32) {
    %c0_i32 = arith.constant 0 : i32
    %c0_i32_0 = arith.constant 0 : i32
    return %arg1, %c0_i32 : i32, i32
  }
  func.func @transform_1(%arg0: i32, %arg1: i32) -> (i32, i32) {
    %c0_i32 = arith.constant 0 : i32
    %c0_i32_0 = arith.constant 0 : i32
    return %c0_i32, %arg0 : i32, i32
  }
  func.func @transform_2(%arg0: i32, %arg1: i32) -> (i32, i32) {
    %c0_i32 = arith.constant 0 : i32
    %c0_i32_0 = arith.constant 0 : i32
    return %c0_i32, %arg0 : i32, i32
  }
  func.func @transform_3(%arg0: i32, %arg1: i32) -> (i32, i32) {
    %c0_i32 = arith.constant 0 : i32
    return %arg1, %arg0 : i32, i32
  }
}

</mosaic_0001>

<llo_original>
// kernel: apply.1
$region0: #{apply.1}
  #allocation0 [shape = 'u32[]', space=smem, size = 0x4, offset = 0x4, fixed_abs, tag = 'smem constant byte address 0x4 - core index']
  #allocation1 [shape = 'u32[144,128]{1,0:T(1,128)}', space=vmem, size = 0x12000, scoped, tag = 'internal scratch']
  %s0 = inlined_call_operand.vmem [shape: bf16[8,128], index: 0, kind: input, shape index: {}]
  %s1 = inlined_call_operand.hbm [shape: bf16[128,128], index: 1, kind: input, shape index: {}]
  %s2 = inlined_call_operand.vmem [shape: f32[1,128], index: 2, kind: input, shape index: {}]
  %s3 = inlined_call_operand.hbm [shape: f32[8,128], index: 3, kind: output, shape index: {}]
  %s4 = sld [smem:[#allocation0]]
  $region26: #{apply.1} parent=0
    _
  %s6 = ssub.s32 1, %s4
  %s7 = scalar_select 0, %s6, %s4
  $region1: #{apply.1} parent=0
    #allocation2 [shape = 'u8[32768]{0}', space=vmem, size = 0x8000, scoped, tag = 'input window, operand 1, single buffered']
    #allocation3 [shape = 's32[1]{0}', space=sflag, size = 0x4, scoped, tag = 'scoped memory for apply.1']
    #allocation4 [shape = 's32[1]{0}', space=sflag, size = 0x4, scoped, tag = 'scoped memory for apply.1']
    #allocation5 [shape = 'u8[8192]{0}', space=vmem, size = 0x2000, scoped, tag = 'output window, operand 0, single buffered']
    %8 = vsyncpa [#allocation3], 0
    %9 = vsyncpa [#allocation4], 0
    // Predicated region
    $region2: #{apply.1} parent=1 // pred_check
      _
    $region3: #{apply.1} parent=1 // pred_check_branch
      %11 = sbr.rel (0) target = $region5
    $region4: #{apply.1} parent=1 // pred_region
      _
    $region5: #{apply.1} parent=1 // pred_fallthru
      _
    // Predicated region
    $region6: #{apply.1} parent=1 // pred_check
      _
    $region7: #{apply.1} parent=1 // pred_check_branch
      %13 = sbr.rel (0) target = $region9
    $region8: #{apply.1} parent=1 // pred_region
      %s15 = ssub.s32 1024, 1024
      %16 = vsyncadd [#allocation3], %s15
      %s17 = sshll.u32 [#allocation2], 4
      %s18 = int_to_ptr.vmem [resolvable:$true] %s17
      %23 = dma.hbm_to_vmem [thread:$0]  %s1, 1024, %s18, [#allocation3], 64, 64, 4
    $region9: #{apply.1} parent=1 // pred_fallthru
      _
    // Predicated region
    $region10: #{apply.1} parent=1 // pred_check
      _
    $region11: #{apply.1} parent=1 // pred_check_branch
      %25 = sbr.rel (0) target = $region13
    $region12: #{apply.1} parent=1 // pred_region
      _
    $region13: #{apply.1} parent=1 // pred_fallthru
      _
    // Predicated region
    $region14: #{apply.1} parent=1 // pred_check
      _
    $region15: #{apply.1} parent=1 // pred_check_branch
      %27 = sbr.rel (0) target = $region17
    $region16: #{apply.1} parent=1 // pred_region
      %28 = dma.done [#allocation3], 1024
    $region17: #{apply.1} parent=1 // pred_fallthru
      _
    %v30 = vld [vmem:[%s0] sm:$0xf]
    %v31 = vld [vmem:[%s0 + $0x4] sm:$0xf]
    %v32 = vld [vmem:[#allocation2] sm:$0xf]
    %v33 = vld [vmem:[#allocation2 + $0x4] sm:$0xf]
    %v34 = vld [vmem:[#allocation2 + $0x8] sm:$0xf]
    %v35 = vld [vmem:[#allocation2 + $0xc] sm:$0xf]
    %v36 = vld [vmem:[#allocation2 + $0x10] sm:$0xf]
    %v37 = vld [vmem:[#allocation2 + $0x14] sm:$0xf]
    %v38 = vld [vmem:[#allocation2 + $0x18] sm:$0xf]
    %v39 = vld [vmem:[#allocation2 + $0x1c] sm:$0xf]
    %v40 = vld [vmem:[#allocation2 + $0x20] sm:$0xf]
    %v41 = vld [vmem:[#allocation2 + $0x24] sm:$0xf]
    %v42 = vld [vmem:[#allocation2 + $0x28] sm:$0xf]
    %v43 = vld [vmem:[#allocation2 + $0x2c] sm:$0xf]
    %v44 = vld [vmem:[#allocation2 + $0x30] sm:$0xf]
    %v45 = vld [vmem:[#allocation2 + $0x34] sm:$0xf]
    %v46 = vld [vmem:[#allocation2 + $0x38] sm:$0xf]
    %v47 = vld [vmem:[#allocation2 + $0x3c] sm:$0xf]
    %v48 = vld [vmem:[%s2] sm:$0x1]
    %v50 = vlaneseq
    %v51 = vshrl.u32 %v50, 7
    %v52 = vsub.s32 0, %v51
    %v53 = vrot.slane %v48, %v52
    %v57 = vunpack.c.l.b16 %v30
    %v58 = vunpack.c.l.b16 %v31
    %v59 = vpack.c.b16 %v58, %v57
    %v77 = vunpack.c.l.b16 %v32
    %v78 = vunpack.c.l.b16 %v33
    %v79 = vunpack.c.l.b16 %v34
    %v80 = vunpack.c.l.b16 %v35
    %v81 = vunpack.c.l.b16 %v36
    %v82 = vunpack.c.l.b16 %v37
    %v83 = vunpack.c.l.b16 %v38
    %v84 = vunpack.c.l.b16 %v39
    %v85 = vunpack.c.l.b16 %v40
    %v86 = vunpack.c.l.b16 %v41
    %v87 = vunpack.c.l.b16 %v42
    %v88 = vunpack.c.l.b16 %v43
    %v89 = vunpack.c.l.b16 %v44
    %v90 = vunpack.c.l.b16 %v45
    %v91 = vunpack.c.l.b16 %v46
    %v92 = vunpack.c.l.b16 %v47
    %v93 = vpack.c.b16 %v78, %v77
    %v94 = vpack.c.b16 %v80, %v79
    %v95 = vpack.c.b16 %v82, %v81
    %v96 = vpack.c.b16 %v84, %v83
    %v97 = vpack.c.b16 %v86, %v85
    %v98 = vpack.c.b16 %v88, %v87
    %v99 = vpack.c.b16 %v90, %v89
    %v100 = vpack.c.b16 %v92, %v91
    %109 = vmatprep.subr.bf16.mxu0 0
    %110 = vmatpush1.bf16.msra.mxu0 %v100
    %111 = vmatprep.subr.bf16.mxu0 0
    %112 = vmatpush1.bf16.msra.mxu0 %v99
    %113 = vmatprep.subr.bf16.mxu0 0
    %114 = vmatpush1.bf16.msra.mxu0 %v98
    %115 = vmatprep.subr.bf16.mxu0 0
    %116 = vmatpush1.bf16.msra.mxu0 %v97
    %117 = vmatprep.subr.bf16.mxu0 0
    %118 = vmatpush1.bf16.msra.mxu0 %v96
    %119 = vmatprep.subr.bf16.mxu0 0
    %120 = vmatpush1.bf16.msra.mxu0 %v95
    %121 = vmatprep.subr.bf16.mxu0 0
    %122 = vmatpush1.bf16.msra.mxu0 %v94
    %123 = vmatprep.subr.bf16.mxu0 0
    %124 = vmatpush1.bf16.msra.mxu0 %v93
    %125 = vmatprep.subr.bf16.mxu0 0
    %126 = vmatpush2.bf16.msra.mxu0 0
    %127 = vmatprep.subr.bf16.mxu0 0
    %128 = vmatpush2.bf16.msra.mxu0 0
    %129 = vmatprep.subr.bf16.mxu0 0
    %130 = vmatpush2.bf16.msra.mxu0 0
    %131 = vmatprep.subr.bf16.mxu0 0
    %132 = vmatpush2.bf16.msra.mxu0 0
    %133 = vmatprep.subr.bf16.mxu0 0
    %134 = vmatpush2.bf16.msra.mxu0 0
    %135 = vmatprep.subr.bf16.mxu0 0
    %136 = vmatpush2.bf16.msra.mxu0 0
    %137 = vmatprep.subr.bf16.mxu0 0
    %138 = vmatpush2.bf16.msra.mxu0 0
    %139 = vmatprep.subr.bf16.mxu0 0
    %140 = vmatpush2.bf16.msra.mxu0 0
    %141 = vmatprep.mubr.bf16.mxu0 0
    %142 = vmatmul.mubr.bf16.gmra.mxu0 %v59
    %v143 = vpop.f32.mrf.mxu0
    %v144 = vadd.f32 %v53, %v143
    %v145 = vpop.f32.mrf.mxu0
    %v146 = vpop.f32.mrf.mxu0
    %v147 = vadd.f32 %v53, %v146
    %v148 = vpop.f32.mrf.mxu0
    %149 = vdwg.mxu0
    %v150 = vmax.f32 %v144, 0.0
    %v151 = vmax.f32 %v147, 0.0
    %152 = vst [vmem:[#allocation5] sm:$0xff] %v150
    %153 = vst [vmem:[#allocation5 + $0x8] sm:$0xff] %v151
    // Predicated region
    $region18: #{apply.1} parent=1 // pred_check
      _
    $region19: #{apply.1} parent=1 // pred_check_branch
      %155 = sbr.rel (0) target = $region21
    $region20: #{apply.1} parent=1 // pred_region
      %s157 = ssub.s32 256, 128
      %158 = vsyncadd [#allocation4], %s157
      %s159 = sshll.u32 [#allocation5], 4
      %s160 = int_to_ptr.vmem [resolvable:$true] %s159
      %165 = dma.vmem_to_hbm [thread:$0]  %s160, 128, %s3, [#allocation4], 128, 128, 8
    $region21: #{apply.1} parent=1 // pred_fallthru
      _
    // Predicated region
    $region22: #{apply.1} parent=1 // pred_check
      _
    $region23: #{apply.1} parent=1 // pred_check_branch
      %167 = sbr.rel (0) target = $region25
    $region24: #{apply.1} parent=1 // pred_region
      %168 = dma.done [#allocation4], 256
    $region25: #{apply.1} parent=1 // pred_fallthru
      _
    %169 = vsyncpa [#allocation3], 1
    %170 = vsyncpa [#allocation4], 1

</llo_original>
